<compile_context>
chip_gen: v7x
topology: tpu7x:2x2x1
jax: 0.10.0
libtpu: 0.0.40
codegen_flags: <defaults>
</compile_context>

<pallas_src>
import jax
import jax.numpy as jnp
from jax.experimental import pallas as pl
from jax.experimental.pallas import tpu as pltpu


def _round_up(x, m):
    return ((x + m - 1) // m) * m


# ------------------------------------------------------------------------
# Pallas kernel: fused Linear -> LeakyReLU(0.2) -> Linear(H -> 1)
# ------------------------------------------------------------------------
def _rocs_scorer_kernel(x_ref, w1_ref, b1_ref, w2r_ref, b2_ref, o_ref):
    # x_ref  : (TM, D_in)  VMEM  (f32 or bf16)
    # w1_ref : (D_in, H)   VMEM  (same dtype as x)
    # b1_ref : (1, H)      VMEM  f32
    # w2r_ref: (1, H)      VMEM  f32   (second-layer weight as a lane vector)
    # b2_ref : (1, 1)      VMEM  f32
    # o_ref  : (TM, 1)     VMEM  f32
    x = x_ref[...]
    # Layer 1 on the MXU, f32 accumulation (bf16-native when inputs are bf16).
    h = jnp.dot(x, w1_ref[...], preferred_element_type=jnp.float32) + b1_ref[...]
    # LeakyReLU with negative_slope=0.2 (EGNN_MLP hidden nonlinearity).
    h = jnp.where(h > 0, h, 0.2 * h)
    # Layer 2 (H -> 1): a (TM,64)@(64,1) matmul has near-zero MXU utilization,
    # so do it as a VPU multiply + XLU lane reduction instead (free slots here).
    scores = jnp.sum(h * w2r_ref[...], axis=-1, keepdims=True) + b2_ref[...]
    o_ref[...] = scores.astype(o_ref.dtype)


def rocs_scorer_pallas(feats, w1, b1, w2, b2, *, tile_m=1024):
    """Fused ROCS_scorer MLP: Linear(D_in->H) -> LeakyReLU(0.2) -> Linear(H->1).

    feats: (N, D_in) float32 or bfloat16
    w1:    (D_in, H), b1: (H,)          (stored transposed vs. torch Linear)
    w2:    (H, 1),    b2: (1,)
    returns (N, 1) float32
    """
    n, d_in = feats.shape
    h_dim = w1.shape[1]
    d_out = w2.shape[1]
    assert d_out == 1, "ROCS_scorer output dim must be 1"

    # Weights are tiny; cast to the activation dtype so bf16 activations use
    # the bf16-native MXU path. Bias/second layer stay f32.
    w1c = w1.astype(feats.dtype)
    b1_2d = b1.reshape(1, h_dim).astype(jnp.float32)
    w2r = jnp.transpose(w2).astype(jnp.float32)          # (1, H)
    b2_2d = b2.reshape(1, d_out).astype(jnp.float32)

    # Large, 8-aligned row tile (default 1024: ~1.5 MiB f32 per block, ~3 MiB
    # double-buffered — well inside VMEM on v5e/v6e/v7x). Clamp for tiny N so
    # we don't compute on a mostly out-of-bounds block.
    tile_m = max(8, (int(tile_m) // 8) * 8)
    tile_m_eff = min(tile_m, _round_up(n, 8))
    grid = (pl.cdiv(n, tile_m_eff),)   # ragged last block handled by Pallas masking

    out = pl.pallas_call(
        _rocs_scorer_kernel,
        out_shape=jax.ShapeDtypeStruct((n, d_out), jnp.float32),
        grid_spec=pltpu.PrefetchScalarGridSpec(
            num_scalar_prefetch=0,
            grid=grid,
            in_specs=[
                pl.BlockSpec((tile_m_eff, d_in), lambda i: (i, 0)),
                # Constant index maps -> weights/biases stay VMEM-resident.
                pl.BlockSpec((d_in, h_dim), lambda i: (0, 0)),
                pl.BlockSpec((1, h_dim), lambda i: (0, 0)),
                pl.BlockSpec((1, h_dim), lambda i: (0, 0)),
                pl.BlockSpec((1, d_out), lambda i: (0, 0)),
            ],
            out_specs=pl.BlockSpec((tile_m_eff, d_out), lambda i: (i, 0)),
        ),
        compiler_params=pltpu.CompilerParams(
            dimension_semantics=("parallel",),
        ),
    )(feats, w1c, b1_2d, w2r, b2_2d)
    return out


# ------------------------------------------------------------------------
# Model wrapper mirroring ROCS_Model_Point_Cloud.forward's defined compute
# ------------------------------------------------------------------------
class ROCSModelPointCloudPallas:
    def __init__(self, num_components=64, EGNN_layer_dim=64,
                 output_MLP_hidden_dim=64, subtract_latent_space=False,
                 seed=0):
        if not subtract_latent_space:
            concat_dim = num_components * 3 + EGNN_layer_dim * 3
        else:
            concat_dim = num_components * 3 + EGNN_layer_dim * 4
        self.concat_dim = concat_dim
        self.hidden_dim = output_MLP_hidden_dim
        self.out_dim = 1

        # Deterministic PyTorch-style Linear init: U(-1/sqrt(fan_in), 1/sqrt(fan_in))
        key = jax.random.PRNGKey(seed)
        k1, k2, k3, k4 = jax.random.split(key, 4)
        lim1 = 1.0 / (concat_dim ** 0.5)
        lim2 = 1.0 / (output_MLP_hidden_dim ** 0.5)
        # stored transposed relative to torch: (in, out)
        self.w1 = jax.random.uniform(k1, (concat_dim, output_MLP_hidden_dim),
                                     jnp.float32, -lim1, lim1)
        self.b1 = jax.random.uniform(k2, (output_MLP_hidden_dim,),
                                     jnp.float32, -lim1, lim1)
        self.w2 = jax.random.uniform(k3, (output_MLP_hidden_dim, self.out_dim),
                                     jnp.float32, -lim2, lim2)
        self.b2 = jax.random.uniform(k4, (self.out_dim,),
                                     jnp.float32, -lim2, lim2)

    def forward(self, graph_subgraph_select_features_concat, *, tile_m=1024):
        # TODO(synk): Encoder_point_cloud is undefined in the provided source;
        # its concatenated output features are taken as the input here and the
        # remaining Encoder-internal outputs are returned as None.
        scores = rocs_scorer_pallas(
            graph_subgraph_select_features_concat,
            self.w1, self.b1, self.w2, self.b2, tile_m=tile_m,
        )
        Z_equi_mean = Z_equi_std = Z_inv_mean = Z_inv_std = None
        h_mean = h_std = h_reshaped_gnn = h_predicted_reshaped = h_reshaped = None
        return (scores, Z_equi_mean, Z_equi_std, Z_inv_mean, Z_inv_std,
                h_mean, h_std, h_reshaped_gnn, h_predicted_reshaped, h_reshaped)


# ------------------------------------------------------------------------
# Pure-JAX reference for correctness checking
# ------------------------------------------------------------------------
def _reference_scorer(x, w1, b1, w2, b2):
    h = jnp.dot(x, w1, precision=jax.lax.Precision.HIGHEST) + b1
    h = jnp.where(h > 0, h, 0.2 * h)
    return jnp.dot(h, w2, precision=jax.lax.Precision.HIGHEST) + b2


if __name__ == "__main__":
    model = ROCSModelPointCloudPallas(seed=0)
    k_a, k_b = jax.random.split(jax.random.PRNGKey(0))

    # --- Test 1: small ragged batch (single grid step, masked tail rows) ----
    n_small = 37
    feats_small = jax.random.normal(k_a, (n_small, model.concat_dim), jnp.float32)
    scores_small = jax.block_until_ready(model.forward(feats_small)[0])
    ref_small = _reference_scorer(feats_small, model.w1, model.b1, model.w2, model.b2)
    assert scores_small.shape == (n_small, 1), scores_small.shape
    assert jnp.allclose(scores_small, ref_small, atol=2e-2, rtol=2e-2), \
        "small-batch mismatch vs reference"

    # --- Test 2: multi-tile grid with a ragged last block (f32) -------------
    n_big = 2500   # tile_m=1024 -> 3 grid steps, last one ragged
    feats_big = jax.random.normal(k_b, (n_big, model.concat_dim), jnp.float32)
    scores_big = jax.block_until_ready(model.forward(feats_big)[0])
    ref_big = _reference_scorer(feats_big, model.w1, model.b1, model.w2, model.b2)
    assert scores_big.shape == (n_big, 1), scores_big.shape
    assert jnp.allclose(scores_big, ref_big, atol=2e-2, rtol=2e-2), \
        "multi-tile mismatch vs reference"

    # --- Test 3: bf16 activation path (halves HBM traffic on v5e/v6e) -------
    feats_bf16 = feats_big.astype(jnp.bfloat16)
    scores_bf16 = jax.block_until_ready(
        rocs_scorer_pallas(feats_bf16, model.w1, model.b1, model.w2, model.b2))
    ref_bf16 = _reference_scorer(
        feats_bf16.astype(jnp.float32),
        model.w1.astype(jnp.bfloat16).astype(jnp.float32),
        model.b1, model.w2, model.b2)
    assert scores_bf16.shape == (n_big, 1), scores_bf16.shape
    assert jnp.allclose(scores_bf16, ref_bf16, atol=3e-2, rtol=3e-2), \
        "bf16 mismatch vs reference"

    print("KERNEL_OK")
</pallas_src>

<mosaic_0001>
module attributes {stable_mosaic.version = 11 : i64} {
  func.func @_rocs_scorer_kernel(%arg0: i32, %arg1: memref<40x384xf32, #tpu.memory_space<vmem>>, %arg2: memref<384x64xf32, #tpu.memory_space<vmem>>, %arg3: memref<1x64xf32, #tpu.memory_space<vmem>>, %arg4: memref<1x64xf32, #tpu.memory_space<vmem>>, %arg5: memref<1x1xf32, #tpu.memory_space<vmem>>, %arg6: memref<40x1xf32, #tpu.memory_space<vmem>>) attributes {dimension_semantics = [#tpu.dimension_semantics<parallel>], iteration_bounds = array<i64: 1>, scalar_prefetch = 0 : i64, scratch_operands = 0 : i64, tpu.core_type = #tpu.core_type<tc>, window_params = [{transform_indices = @transform_0, window_bounds = array<i64: 40, 384>}, {pipeline_mode = #tpu.pipeline_mode<synchronous>, transform_indices = @transform_1, window_bounds = array<i64: 384, 64>}, {pipeline_mode = #tpu.pipeline_mode<synchronous>, transform_indices = @transform_2, window_bounds = array<i64: 1, 64>}, {pipeline_mode = #tpu.pipeline_mode<synchronous>, transform_indices = @transform_3, window_bounds = array<i64: 1, 64>}, {pipeline_mode = #tpu.pipeline_mode<synchronous>, transform_indices = @transform_4, window_bounds = array<i64: 1, 1>}, {transform_indices = @transform_5, window_bounds = array<i64: 40, 1>}]} {
    %c0 = arith.constant 0 : index
    %c0_0 = arith.constant 0 : index
    %0 = vector.load %arg1[%c0, %c0_0] : memref<40x384xf32, #tpu.memory_space<vmem>>, vector<40x384xf32>
    %c0_1 = arith.constant 0 : index
    %c0_2 = arith.constant 0 : index
    %1 = vector.load %arg2[%c0_1, %c0_2] : memref<384x64xf32, #tpu.memory_space<vmem>>, vector<384x64xf32>
    %cst = arith.constant dense<0.000000e+00> : vector<40x64xf32>
    %2 = tpu.matmul %0, %1, %cst {dimension_numbers = #tpu.dot_dimension_numbers<[1], [0], [0], [1], [0, 0, 1, 1], [], []>} : vector<40x384xf32>, vector<384x64xf32>, vector<40x64xf32> -> vector<40x64xf32>
    %c0_3 = arith.constant 0 : index
    %c0_4 = arith.constant 0 : index
    %3 = vector.load %arg3[%c0_3, %c0_4] : memref<1x64xf32, #tpu.memory_space<vmem>>, vector<1x64xf32>
    %4 = vector.broadcast %3 : vector<1x64xf32> to vector<40x64xf32>
    %5 = arith.addf %2, %4 : vector<40x64xf32>
    %cst_5 = arith.constant 0.000000e+00 : f32
    %6 = vector.broadcast %cst_5 : f32 to vector<40x64xf32>
    %7 = arith.cmpf ogt, %5, %6 : vector<40x64xf32>
    %cst_6 = arith.constant 2.000000e-01 : f32
    %8 = vector.broadcast %cst_6 : f32 to vector<40x64xf32>
    %9 = arith.mulf %8, %5 : vector<40x64xf32>
    %10 = arith.select %7, %5, %9 : vector<40x64xi1>, vector<40x64xf32>
    %c0_7 = arith.constant 0 : index
    %c0_8 = arith.constant 0 : index
    %11 = vector.load %arg4[%c0_7, %c0_8] : memref<1x64xf32, #tpu.memory_space<vmem>>, vector<1x64xf32>
    %12 = vector.broadcast %11 : vector<1x64xf32> to vector<40x64xf32>
    %13 = arith.mulf %10, %12 : vector<40x64xf32>
    %cst_9 = arith.constant dense<0.000000e+00> : vector<40xf32>
    %14 = vector.multi_reduction <add>, %13, %cst_9 [1] : vector<40x64xf32> to vector<40xf32>
    %15 = vector.shape_cast %14 : vector<40xf32> to vector<40x1xf32>
    %c0_10 = arith.constant 0 : index
    %c0_11 = arith.constant 0 : index
    %16 = vector.load %arg5[%c0_10, %c0_11] : memref<1x1xf32, #tpu.memory_space<vmem>>, vector<1x1xf32>
    %17 = vector.broadcast %16 : vector<1x1xf32> to vector<40x1xf32>
    %18 = arith.addf %15, %17 : vector<40x1xf32>
    %c0_12 = arith.constant 0 : index
    %c0_13 = arith.constant 0 : index
    %19 = vector.load %arg6[%c0_12, %c0_13] : memref<40x1xf32, #tpu.memory_space<vmem>>, vector<40x1xf32>
    tpu.vector_store %arg6[%c0_12, %c0_13], %18 {strides = array<i32>} : memref<40x1xf32, #tpu.memory_space<vmem>>, vector<40x1xf32>,
    return
  }
  func.func @transform_0(%arg0: i32) -> (i32, i32) {
    %c0_i32 = arith.constant 0 : i32
    %c0_i32_0 = arith.constant 0 : i32
    return %arg0, %c0_i32 : i32, i32
  }
  func.func @transform_1(%arg0: i32) -> (i32, i32) {
    %c0_i32 = arith.constant 0 : i32
    %c0_i32_0 = arith.constant 0 : i32
    %c0_i32_1 = arith.constant 0 : i32
    return %c0_i32, %c0_i32_0 : i32, i32
  }
  func.func @transform_2(%arg0: i32) -> (i32, i32) {
    %c0_i32 = arith.constant 0 : i32
    %c0_i32_0 = arith.constant 0 : i32
    %c0_i32_1 = arith.constant 0 : i32
    return %c0_i32, %c0_i32_0 : i32, i32
  }
  func.func @transform_3(%arg0: i32) -> (i32, i32) {
    %c0_i32 = arith.constant 0 : i32
    %c0_i32_0 = arith.constant 0 : i32
    %c0_i32_1 = arith.constant 0 : i32
    return %c0_i32, %c0_i32_0 : i32, i32
  }
  func.func @transform_4(%arg0: i32) -> (i32, i32) {
    %c0_i32 = arith.constant 0 : i32
    %c0_i32_0 = arith.constant 0 : i32
    %c0_i32_1 = arith.constant 0 : i32
    return %c0_i32, %c0_i32_0 : i32, i32
  }
  func.func @transform_5(%arg0: i32) -> (i32, i32) {
    %c0_i32 = arith.constant 0 : i32
    %c0_i32_0 = arith.constant 0 : i32
    return %arg0, %c0_i32 : i32, i32
  }
}

</mosaic_0001>

<llo_original>
// kernel: tpu_custom_call.1
$region0: #{tpu_custom_call.1}
  #allocation0 [shape = 'u32[]', space=smem, size = 0x4, offset = 0x4, fixed_abs, tag = 'smem constant byte address 0x4 - core index']
  #allocation1 [shape = 'u32[144,128]{1,0:T(1,128)}', space=vmem, size = 0x12000, scoped, tag = 'internal scratch']
  #allocation2 [shape = 'f32[1,1]{1,0:T(1,128)S(1)}', space=vmem, size = 0x200, scoped, tag = 'scoped memory for tpu_custom_call.1']
  %s0 = inlined_call_operand.vmem [shape: f32[37,384], index: 0, kind: input, shape index: {}]
  %s1 = inlined_call_operand.vmem [shape: f32[384,64], index: 1, kind: input, shape index: {}]
  %s2 = inlined_call_operand.vmem [shape: f32[1,64], index: 2, kind: input, shape index: {}]
  %s3 = inlined_call_operand.vmem [shape: f32[1,64], index: 3, kind: input, shape index: {}]
  %s4 = inlined_call_operand.<no memory space> [shape: f32[1,1], index: 4, kind: input, shape index: {}]
  %s5 = inlined_call_operand.vmem [shape: f32[37,1], index: 5, kind: output, shape index: {}]
  %s6 = sld [smem:[#allocation0]]
  $region30: #{tpu_custom_call.1} parent=0
    _
  %s8 = ssub.s32 1, %s6
  %s9 = scalar_select 0, %s8, %s6
  %v10 = vstv %s4
  %11 = vst [vmem:[#allocation2] sm:$0x1] %v10
  // Predicated region
  $region2: #{tpu_custom_call.1} parent=0 // pred_check
    _
  $region3: #{tpu_custom_call.1} parent=0 // pred_check_branch
    %13 = sbr.rel (0) target = $region5
  $region4: #{tpu_custom_call.1} parent=0 // pred_region
    _
  $region5: #{tpu_custom_call.1} parent=0 // pred_fallthru
    _
  // Predicated region
  $region6: #{tpu_custom_call.1} parent=0 // pred_check
    _
  $region7: #{tpu_custom_call.1} parent=0 // pred_check_branch
    %15 = sbr.rel (0) target = $region9
  $region8: #{tpu_custom_call.1} parent=0 // pred_region
    _
  $region9: #{tpu_custom_call.1} parent=0 // pred_fallthru
    _
  // Predicated region
  $region10: #{tpu_custom_call.1} parent=0 // pred_check
    _
  $region11: #{tpu_custom_call.1} parent=0 // pred_check_branch
    %17 = sbr.rel (0) target = $region13
  $region12: #{tpu_custom_call.1} parent=0 // pred_region
    _
  $region13: #{tpu_custom_call.1} parent=0 // pred_fallthru
    _
  // Predicated region
  $region14: #{tpu_custom_call.1} parent=0 // pred_check
    _
  $region15: #{tpu_custom_call.1} parent=0 // pred_check_branch
    %19 = sbr.rel (0) target = $region17
  $region16: #{tpu_custom_call.1} parent=0 // pred_region
    _
  $region17: #{tpu_custom_call.1} parent=0 // pred_fallthru
    _
  // Predicated region
  $region18: #{tpu_custom_call.1} parent=0 // pred_check
    _
  $region19: #{tpu_custom_call.1} parent=0 // pred_check_branch
    %21 = sbr.rel (0) target = $region21
  $region20: #{tpu_custom_call.1} parent=0 // pred_region
    _
  $region21: #{tpu_custom_call.1} parent=0 // pred_fallthru
    _
  %v22 = vld [vmem:[%s0] sm:$0xff]
  %v23 = vld [vmem:[%s0 + $0x8] sm:$0xff]
  %v24 = vld [vmem:[%s0 + $0x10] sm:$0xff]
  %v25 = vld [vmem:[%s0 + $0x18] sm:$0xff]
  %v26 = vld [vmem:[%s0 + $0x20] sm:$0xff]
  %v27 = vld [vmem:[%s0 + $0x28] sm:$0xff]
  %v28 = vld [vmem:[%s0 + $0x30] sm:$0xff]
  %v29 = vld [vmem:[%s0 + $0x38] sm:$0xff]
  %v30 = vld [vmem:[%s0 + $0x40] sm:$0xff]
  %v31 = vld [vmem:[%s0 + $0x48] sm:$0xff]
  %v32 = vld [vmem:[%s0 + $0x50] sm:$0xff]
  %v33 = vld [vmem:[%s0 + $0x58] sm:$0xff]
  %v34 = vld [vmem:[%s0 + $0x60] sm:$0xff]
  %v35 = vld [vmem:[%s0 + $0x68] sm:$0xff]
  %v36 = vld [vmem:[%s0 + $0x70] sm:$0xff]
  %v37 = vld [vmem:[%s1] sm:$0xff]
  %v38 = vld [vmem:[%s1 + $0x8] sm:$0xff]
  %v39 = vld [vmem:[%s1 + $0x10] sm:$0xff]
  %v40 = vld [vmem:[%s1 + $0x18] sm:$0xff]
  %v41 = vld [vmem:[%s1 + $0x20] sm:$0xff]
  %v42 = vld [vmem:[%s1 + $0x28] sm:$0xff]
  %v43 = vld [vmem:[%s1 + $0x30] sm:$0xff]
  %v44 = vld [vmem:[%s1 + $0x38] sm:$0xff]
  %v45 = vld [vmem:[%s1 + $0x40] sm:$0xff]
  %v46 = vld [vmem:[%s1 + $0x48] sm:$0xff]
  %v47 = vld [vmem:[%s1 + $0x50] sm:$0xff]
  %v48 = vld [vmem:[%s1 + $0x58] sm:$0xff]
  %v49 = vld [vmem:[%s1 + $0x60] sm:$0xff]
  %v50 = vld [vmem:[%s1 + $0x68] sm:$0xff]
  %v51 = vld [vmem:[%s1 + $0x70] sm:$0xff]
  %v52 = vld [vmem:[%s1 + $0x78] sm:$0xff]
  %v53 = vld [vmem:[%s1 + $0x80] sm:$0xff]
  %v54 = vld [vmem:[%s1 + $0x88] sm:$0xff]
  %v55 = vld [vmem:[%s1 + $0x90] sm:$0xff]
  %v56 = vld [vmem:[%s1 + $0x98] sm:$0xff]
  %v57 = vld [vmem:[%s1 + $0xa0] sm:$0xff]
  %v58 = vld [vmem:[%s1 + $0xa8] sm:$0xff]
  %v59 = vld [vmem:[%s1 + $0xb0] sm:$0xff]
  %v60 = vld [vmem:[%s1 + $0xb8] sm:$0xff]
  %v61 = vld [vmem:[%s1 + $0xc0] sm:$0xff]
  %v62 = vld [vmem:[%s1 + $0xc8] sm:$0xff]
  %v63 = vld [vmem:[%s1 + $0xd0] sm:$0xff]
  %v64 = vld [vmem:[%s1 + $0xd8] sm:$0xff]
  %v65 = vld [vmem:[%s1 + $0xe0] sm:$0xff]
  %v66 = vld [vmem:[%s1 + $0xe8] sm:$0xff]
  %v67 = vld [vmem:[%s1 + $0xf0] sm:$0xff]
  %v68 = vld [vmem:[%s1 + $0xf8] sm:$0xff]
  %v69 = vld [vmem:[%s1 + $0x100] sm:$0xff]
  %v70 = vld [vmem:[%s1 + $0x108] sm:$0xff]
  %v71 = vld [vmem:[%s1 + $0x110] sm:$0xff]
  %v72 = vld [vmem:[%s1 + $0x118] sm:$0xff]
  %v73 = vld [vmem:[%s1 + $0x120] sm:$0xff]
  %v74 = vld [vmem:[%s1 + $0x128] sm:$0xff]
  %v75 = vld [vmem:[%s1 + $0x130] sm:$0xff]
  %v76 = vld [vmem:[%s1 + $0x138] sm:$0xff]
  %v77 = vld [vmem:[%s1 + $0x140] sm:$0xff]
  %v78 = vld [vmem:[%s1 + $0x148] sm:$0xff]
  %v79 = vld [vmem:[%s1 + $0x150] sm:$0xff]
  %v80 = vld [vmem:[%s1 + $0x158] sm:$0xff]
  %v81 = vld [vmem:[%s1 + $0x160] sm:$0xff]
  %v82 = vld [vmem:[%s1 + $0x168] sm:$0xff]
  %v83 = vld [vmem:[%s1 + $0x170] sm:$0xff]
  %v84 = vld [vmem:[%s1 + $0x178] sm:$0xff]
  %v85 = vld [vmem:[%s2] sm:$0x1]
  %v87 = vlaneseq
  %v88 = vshrl.u32 %v87, 7
  %v89 = vsub.s32 0, %v88
  %v90 = vrot.slane %v85, %v89
  %92 = vmatprep.subr.mxu0 0.0
  %93 = vmatpush1.msra.mxu0 %v37
  %94 = vmatprep.subr.mxu0 0.0
  %95 = vmatpush1.msra.mxu0 %v38
  %96 = vmatprep.subr.mxu0 0.0
  %97 = vmatpush1.msra.mxu0 %v39
  %98 = vmatprep.subr.mxu0 0.0
  %99 = vmatpush1.msra.mxu0 %v40
  %100 = vmatprep.subr.mxu0 0.0
  %101 = vmatpush1.msra.mxu0 %v41
  %102 = vmatprep.subr.mxu0 0.0
  %103 = vmatpush1.msra.mxu0 %v42
  %104 = vmatprep.subr.mxu0 0.0
  %105 = vmatpush1.msra.mxu0 %v43
  %106 = vmatprep.subr.mxu0 0.0
  %107 = vmatpush1.msra.mxu0 %v44
  %108 = vmatprep.subr.mxu0 0.0
  %109 = vmatpush1.msra.mxu0 %v45
  %110 = vmatprep.subr.mxu0 0.0
  %111 = vmatpush1.msra.mxu0 %v46
  %112 = vmatprep.subr.mxu0 0.0
  %113 = vmatpush1.msra.mxu0 %v47
  %114 = vmatprep.subr.mxu0 0.0
  %115 = vmatpush1.msra.mxu0 %v48
  %116 = vmatprep.subr.mxu0 0.0
  %117 = vmatpush1.msra.mxu0 %v49
  %118 = vmatprep.subr.mxu0 0.0
  %119 = vmatpush1.msra.mxu0 %v50
  %120 = vmatprep.subr.mxu0 0.0
  %121 = vmatpush1.msra.mxu0 %v51
  %122 = vmatprep.subr.mxu0 0.0
  %123 = vmatpush1.msra.mxu0 %v52
  %124 = vmatprep.subr.mxu0 0.0
  %125 = vmatpush1.msra.mxu0 %v53
  %126 = vmatprep.subr.mxu0 0.0
  %127 = vmatpush1.msra.mxu0 %v54
  %128 = vmatprep.subr.mxu0 0.0
  %129 = vmatpush1.msra.mxu0 %v55
  %130 = vmatprep.subr.mxu0 0.0
  %131 = vmatpush1.msra.mxu0 %v56
  %132 = vmatprep.subr.mxu0 0.0
  %133 = vmatpush1.msra.mxu0 %v57
  %134 = vmatprep.subr.mxu0 0.0
  %135 = vmatpush1.msra.mxu0 %v58
  %136 = vmatprep.subr.mxu0 0.0
  %137 = vmatpush1.msra.mxu0 %v59
  %138 = vmatprep.subr.mxu0 0.0
  %139 = vmatpush1.msra.mxu0 %v60
  %140 = vmatprep.subr.mxu0 0.0
  %141 = vmatpush1.msra.mxu0 %v61
  %142 = vmatprep.subr.mxu0 0.0
  %143 = vmatpush1.msra.mxu0 %v62
  %144 = vmatprep.subr.mxu0 0.0
  %145 = vmatpush1.msra.mxu0 %v63
  %146 = vmatprep.subr.mxu0 0.0
  %147 = vmatpush1.msra.mxu0 %v64
  %148 = vmatprep.subr.mxu0 0.0
  %149 = vmatpush1.msra.mxu0 %v65
  %150 = vmatprep.subr.mxu0 0.0
  %151 = vmatpush1.msra.mxu0 %v66
  %152 = vmatprep.subr.mxu0 0.0
  %153 = vmatpush1.msra.mxu0 %v67
  %154 = vmatprep.subr.mxu0 0.0
  %155 = vmatpush1.msra.mxu0 %v68
  %156 = vmatprep.mubr.f32.mxu0 %v23
  %157 = vmatmul.mubr.f32.gmra.mrb[0].mxu0 %v22
  %v158 = vpop.f32.mrb[0].mxu0
  %v159 = vadd.f32 %v90, %v158
  %v160 = vpop.f32.mrb[0].mxu0
  %161 = vmatprep.mubr.f32.mxu0 %v26
  %162 = vmatmul.mubr.f32.gmra.mrb[0].mxu0 %v25
  %v163 = vpop.f32.mrb[0].mxu0
  %v164 = vadd.f32 %v90, %v163
  %v165 = vpop.f32.mrb[0].mxu0
  %166 = vmatprep.mubr.f32.mxu0 %v29
  %167 = vmatmul.mubr.f32.gmra.mrb[0].mxu0 %v28
  %v168 = vpop.f32.mrb[0].mxu0
  %v169 = vadd.f32 %v90, %v168
  %v170 = vpop.f32.mrb[0].mxu0
  %171 = vmatprep.mubr.f32.mxu0 %v32
  %172 = vmatmul.mubr.f32.gmra.mrb[0].mxu0 %v31
  %v173 = vpop.f32.mrb[0].mxu0
  %v174 = vadd.f32 %v90, %v173
  %v175 = vpop.f32.mrb[0].mxu0
  %176 = vmatprep.mubr.f32.mxu0 %v35
  %177 = vmatmul.mubr.f32.gmra.mrb[0].mxu0 %v34
  %v178 = vpop.f32.mrb[0].mxu0
  %v179 = vadd.f32 %v90, %v178
  %v180 = vpop.f32.mrb[0].mxu0
  %181 = vdwg.mxu0
  %182 = vmatprep.subr.mxu0 0.0
  %183 = vmatpush1.msra.mxu0 %v69
  %184 = vmatprep.subr.mxu0 0.0
  %185 = vmatpush1.msra.mxu0 %v70
  %186 = vmatprep.subr.mxu0 0.0
  %187 = vmatpush1.msra.mxu0 %v71
  %188 = vmatprep.subr.mxu0 0.0
  %189 = vmatpush1.msra.mxu0 %v72
  %190 = vmatprep.subr.mxu0 0.0
  %191 = vmatpush1.msra.mxu0 %v73
  %192 = vmatprep.subr.mxu0 0.0
  %193 = vmatpush1.msra.mxu0 %v74
  %194 = vmatprep.subr.mxu0 0.0
  %195 = vmatpush1.msra.mxu0 %v75
  %196 = vmatprep.subr.mxu0 0.0
  %197 = vmatpush1.msra.mxu0 %v76
  %198 = vmatprep.subr.mxu0 0.0
  %199 = vmatpush1.msra.mxu0 %v77
  %200 = vmatprep.subr.mxu0 0.0
  %201 = vmatpush1.msra.mxu0 %v78
  %202 = vmatprep.subr.mxu0 0.0
  %203 = vmatpush1.msra.mxu0 %v79
  %204 = vmatprep.subr.mxu0 0.0
  %205 = vmatpush1.msra.mxu0 %v80
  %206 = vmatprep.subr.mxu0 0.0
  %207 = vmatpush1.msra.mxu0 %v81
  %208 = vmatprep.subr.mxu0 0.0
  %209 = vmatpush1.msra.mxu0 %v82
  %210 = vmatprep.subr.mxu0 0.0
  %211 = vmatpush1.msra.mxu0 %v83
  %212 = vmatprep.subr.mxu0 0.0
  %213 = vmatpush1.msra.mxu0 %v84
  %214 = vmatprep.subr.mxu0 0.0
  %215 = vmatpush1.msra.mxu0 0.0
  %216 = vmatprep.subr.mxu0 0.0
  %217 = vmatpush1.msra.mxu0 0.0
  %218 = vmatprep.subr.mxu0 0.0
  %219 = vmatpush1.msra.mxu0 0.0
  %220 = vmatprep.subr.mxu0 0.0
  %221 = vmatpush1.msra.mxu0 0.0
  %222 = vmatprep.subr.mxu0 0.0
  %223 = vmatpush1.msra.mxu0 0.0
  %224 = vmatprep.subr.mxu0 0.0
  %225 = vmatpush1.msra.mxu0 0.0
  %226 = vmatprep.subr.mxu0 0.0
  %227 = vmatpush1.msra.mxu0 0.0
  %228 = vmatprep.subr.mxu0 0.0
  %229 = vmatpush1.msra.mxu0 0.0
  %230 = vmatprep.subr.mxu0 0.0
  %231 = vmatpush1.msra.mxu0 0.0
  %232 = vmatprep.subr.mxu0 0.0
  %233 = vmatpush1.msra.mxu0 0.0
  %234 = vmatprep.subr.mxu0 0.0
  %235 = vmatpush1.msra.mxu0 0.0
  %236 = vmatprep.subr.mxu0 0.0
  %237 = vmatpush1.msra.mxu0 0.0
  %238 = vmatprep.subr.mxu0 0.0
  %239 = vmatpush1.msra.mxu0 0.0
  %240 = vmatprep.subr.mxu0 0.0
  %241 = vmatpush1.msra.mxu0 0.0
  %242 = vmatprep.subr.mxu0 0.0
  %243 = vmatpush1.msra.mxu0 0.0
  %244 = vmatprep.subr.mxu0 0.0
  %245 = vmatpush1.msra.mxu0 0.0
  %246 = vmatprep.mubr.f32.mxu0 0.0
  %247 = vmatmul.mubr.f32.gmra.mrb[0].mxu0 %v24
  %v248 = vpop.f32.mrb[0].mxu0
  %v249 = vadd.f32 %v159, %v248
  %v250 = vpop.f32.mrb[0].mxu0
  %251 = vmatprep.mubr.f32.mxu0 0.0
  %252 = vmatmul.mubr.f32.gmra.mrb[0].mxu0 %v27
  %v253 = vpop.f32.mrb[0].mxu0
  %v254 = vadd.f32 %v164, %v253
  %v255 = vpop.f32.mrb[0].mxu0
  %256 = vmatprep.mubr.f32.mxu0 0.0
  %257 = vmatmul.mubr.f32.gmra.mrb[0].mxu0 %v30
  %v258 = vpop.f32.mrb[0].mxu0
  %v259 = vadd.f32 %v169, %v258
  %v260 = vpop.f32.mrb[0].mxu0
  %261 = vmatprep.mubr.f32.mxu0 0.0
  %262 = vmatmul.mubr.f32.gmra.mrb[0].mxu0 %v33
  %v263 = vpop.f32.mrb[0].mxu0
  %v264 = vadd.f32 %v174, %v263
  %v265 = vpop.f32.mrb[0].mxu0
  %266 = vmatprep.mubr.f32.mxu0 0.0
  %267 = vmatmul.mubr.f32.gmra.mrb[0].mxu0 %v36
  %v268 = vpop.f32.mrb[0].mxu0
  %v269 = vadd.f32 %v179, %v268
  %v270 = vpop.f32.mrb[0].mxu0
  %271 = vdwg.mxu0
  %vm272 = vcmp.gt.f32.partialorder %v249, 0.0
  %vm273 = vcmp.gt.f32.partialorder %v254, 0.0
  %vm274 = vcmp.gt.f32.partialorder %v259, 0.0
  %vm275 = vcmp.gt.f32.partialorder %v264, 0.0
  %vm276 = vcmp.gt.f32.partialorder %v269, 0.0
  %v277 = vmul.f32 %v249, 0.2
  %v278 = vmul.f32 %v254, 0.2
  %v279 = vmul.f32 %v259, 0.2
  %v280 = vmul.f32 %v264, 0.2
  %v281 = vmul.f32 %v269, 0.2
  %v282 = vsel %vm272, %v249, %v277
  %v283 = vsel %vm273, %v254, %v278
  %v284 = vsel %vm274, %v259, %v279
  %v285 = vsel %vm275, %v264, %v280
  %v286 = vsel %vm276, %v269, %v281
  %v287 = vld [vmem:[%s3] sm:$0x1]
  %v289 = vlaneseq
  %v290 = vshrl.u32 %v289, 7
  %v291 = vsub.s32 0, %v290
  %v292 = vrot.slane %v287, %v291
  %v294 = vmul.f32 %v282, %v292
  %v295 = vmul.f32 %v283, %v292
  %v296 = vmul.f32 %v284, %v292
  %v297 = vmul.f32 %v285, %v292
  %v298 = vmul.f32 %v286, %v292
  %vm299 = vcmask 523264
  %v300 = vsel %vm299, %v294, 0.0
  %301 = vadd.xlane.f32.xlu0 %v300
  %v302 = vpop.xlane.xlu0 %301
  %v303 = vsel %vm299, %v295, 0.0
  %304 = vadd.xlane.f32.xlu0 %v303
  %v305 = vpop.xlane.xlu0 %304
  %v306 = vsel %vm299, %v296, 0.0
  %307 = vadd.xlane.f32.xlu0 %v306
  %v308 = vpop.xlane.xlu0 %307
  %v309 = vsel %vm299, %v297, 0.0
  %310 = vadd.xlane.f32.xlu0 %v309
  %v311 = vpop.xlane.xlu0 %310
  %v312 = vsel %vm299, %v298, 0.0
  %313 = vadd.xlane.f32.xlu0 %v312
  %v314 = vpop.xlane.xlu0 %313
  %v315 = vld [vmem:[#allocation2] sm:$0x1]
  %v317 = vlaneseq
  %v318 = vshrl.u32 %v317, 7
  %v319 = vsub.s32 0, %v318
  %v320 = vrot.slane %v315, %v319
  %v322 = vadd.f32 %v302, %v320
  %v323 = vadd.f32 %v305, %v320
  %v324 = vadd.f32 %v308, %v320
  %v325 = vadd.f32 %v311, %v320
  %v326 = vadd.f32 %v314, %v320
  %vm327 = vcmask 7168
  %328 = vst.msk [vmem:[%s5] sm:$0xff] %vm327, %v322
  %329 = vst.msk [vmem:[%s5 + $0x8] sm:$0xff] %vm327, %v323
  %330 = vst.msk [vmem:[%s5 + $0x10] sm:$0xff] %vm327, %v324
  %331 = vst.msk [vmem:[%s5 + $0x18] sm:$0xff] %vm327, %v325
  %332 = vst.msk [vmem:[%s5 + $0x20] sm:$0xff] %vm327, %v326
  // Predicated region
  $region22: #{tpu_custom_call.1} parent=0 // pred_check
    _
  $region23: #{tpu_custom_call.1} parent=0 // pred_check_branch
    %334 = sbr.rel (0) target = $region25
  $region24: #{tpu_custom_call.1} parent=0 // pred_region
    _
  $region25: #{tpu_custom_call.1} parent=0 // pred_fallthru
    _
  // Predicated region
  $region26: #{tpu_custom_call.1} parent=0 // pred_check
    _
  $region27: #{tpu_custom_call.1} parent=0 // pred_check_branch
    %336 = sbr.rel (0) target = $region29
  $region28: #{tpu_custom_call.1} parent=0 // pred_region
    _
  $region29: #{tpu_custom_call.1} parent=0 // pred_fallthru
    _

</llo_original>
